<compile_context>
chip_gen: v7x
topology: tpu7x:2x2x1
jax: 0.10.0
libtpu: 0.0.40
codegen_flags: <defaults>
</compile_context>

<pallas_src>
import math

import jax
import jax.numpy as jnp
from jax.experimental import pallas as pl
from jax.experimental.pallas import tpu as pltpu

# ---- model hyperparameters (small, consistent with the module) -------------
EMB_DIM = 16        # embedding_dim
HIDDEN = 32         # hidden_size
SEQ_LEN = 8         # max_time
OUT_SIZE = SEQ_LEN  # output_size must equal max_time*batch for the .view()
VOCAB = 50
NUM_LAYERS = 1
BATCH = 1

DT = 0.1
TAU = 100.0
VAR_REC = 0.001
ALPHA = DT / TAU
# NOTE: the PyTorch module adds this *deterministic* constant every step
# (sqrt(2*alpha*var_rec)*0.001), not sampled Gaussian noise; we match the spec.
# TODO(synk): if stochastic recurrent noise is ever wanted, sample it in-kernel
# with pltpu.prng_seed / pltpu.prng_random_bits.
NOISE = math.sqrt(2.0 * ALPHA * VAR_REC) * 0.001

# ---- packed-parameter block layout (one VMEM operand, static row offsets) --
ROW_WIN = 0                         # rows [0,16)  : ALPHA * W_in^T      (16, 32)
ROW_WREC = ROW_WIN + EMB_DIM        # rows [16,48) : ALPHA * W_rec+ * d  (32, 32)
ROW_WOUT = ROW_WREC + HIDDEN        # rows [48,80) : W_out               (32,  8)
ROW_MLPW = ROW_WOUT + HIDDEN        # rows [80,88) : MLP W^T             ( 8,  2)
ROW_MLPB = ROW_MLPW + OUT_SIZE      # row   88     : MLP bias            ( 1,  2)
P_ROWS = ((ROW_MLPB + 1 + 7) // 8) * 8   # pad rows to a sublane multiple -> 96


# ---- Pallas kernel ----------------------------------------------------------
def eirnn_kernel(x_emb_ref,   # (T, N_in)      embedded input sequence
                 params_ref,  # (P_ROWS, N)    packed parameter block
                 out_ref):    # (2T, N_out)    rows [0,T)=seq_out, row T cols[0,2)=softmax
    T = x_emb_ref.shape[0]

    # Static slices into the packed parameter block (zero-cost views).
    w_in_alpha_t = params_ref[ROW_WIN:ROW_WIN + EMB_DIM, :]            # (N_in, N)
    w_rec_scaled = params_ref[ROW_WREC:ROW_WREC + HIDDEN, :]           # (N, N)
    w_out = params_ref[ROW_WOUT:ROW_WOUT + HIDDEN, 0:OUT_SIZE]         # (N, N_out)
    mlp_w_t = params_ref[ROW_MLPW:ROW_MLPW + OUT_SIZE, 0:2]            # (N_out, 2)
    mlp_b = params_ref[ROW_MLPB:ROW_MLPB + 1, 0:2]                     # (1, 2)

    # Hoisted input projection; ALPHA is already folded into the weights and
    # the per-step additive NOISE constant is absorbed here, so the recurrence
    # body below is just (mul, matmul, add) on the serial chain.
    c = jnp.dot(x_emb_ref[...], w_in_alpha_t,
                preferred_element_type=jnp.float32) + NOISE            # (T, N)

    # Recurrence.  T is a small static trip count, so the Python loop fully
    # unrolls at trace time: all indices are static and both the hidden state
    # and the rectified states are carried purely in vregs (no VMEM traffic
    # on or near the dependency chain).
    # TODO(synk): w_rec_scaled is loop-invariant; explicit MXU residency via
    # pltpu.matmul_push_rhs / matmul_acc_lhs would avoid re-latching the RHS
    # every step -- left to Mosaic's lowering here.
    one_minus_alpha = 1.0 - ALPHA
    state = jnp.zeros((BATCH, HIDDEN), jnp.float32)
    rect_rows = []
    for t in range(T):
        rect_prev = jnp.maximum(state, 0.0)
        state = (one_minus_alpha * state
                 + jnp.dot(rect_prev, w_rec_scaled,
                           preferred_element_type=jnp.float32)
                 + c[t:t + 1, :])
        rect_rows.append(jnp.maximum(state, 0.0))

    # Hoisted output projection: single (T, N) @ (N, N_out) matmul on a value
    # assembled from vregs -- no scratch round trip.
    rect_all = jnp.concatenate(rect_rows, axis=0)                      # (T, N)
    seq_out = jnp.dot(rect_all, w_out,
                      preferred_element_type=jnp.float32)              # (T, N_out)

    # Final classifier: last timestep output of the (single) layer, flattened
    # (num_layers*batch*N_out == N_out), then Linear + Softmax(dim=0).
    last_out = seq_out[T - 1:T, :]                                     # (1, N_out)
    out2sig = jnp.dot(last_out, mlp_w_t,
                      preferred_element_type=jnp.float32) + mlp_b      # (1, 2)
    m = jnp.max(out2sig, axis=-1, keepdims=True)
    e = jnp.exp(out2sig - m)
    sm = e / jnp.sum(e, axis=-1, keepdims=True)   # exact divide: one-off (1,2) op

    # Single full-block store (seq_out, softmax row, zero padding).
    sm_row = jnp.concatenate(
        [sm, jnp.zeros((1, OUT_SIZE - 2), jnp.float32)], axis=1)       # (1, N_out)
    pad_rows = jnp.zeros((T - 1, OUT_SIZE), jnp.float32)
    out_ref[...] = jnp.concatenate([seq_out, sm_row, pad_rows], axis=0)


# ---- one-time parameter preparation (all layout work lives here) ------------
def prepare_params(w_in, w_rec_plus, d_sign, w_out, mlp_w, mlp_b):
    """Pack all weights into a single (P_ROWS, HIDDEN) f32 block.

    ALPHA is pre-folded into w_in / w_rec, and d_sign is pre-applied, so the
    kernel's per-step chain carries no extra elementwise work.
    """
    params = jnp.zeros((P_ROWS, HIDDEN), jnp.float32)
    params = params.at[ROW_WIN:ROW_WIN + EMB_DIM, :].set(ALPHA * w_in.T)
    params = params.at[ROW_WREC:ROW_WREC + HIDDEN, :].set(
        ALPHA * (w_rec_plus * d_sign))
    params = params.at[ROW_WOUT:ROW_WOUT + HIDDEN, 0:OUT_SIZE].set(w_out)
    params = params.at[ROW_MLPW:ROW_MLPW + OUT_SIZE, 0:2].set(mlp_w.T)
    params = params.at[ROW_MLPB, 0:2].set(mlp_b)
    return params


@jax.jit
def eirnn_forward_pallas(x_emb, params):
    vmem = pl.BlockSpec(memory_space=pltpu.MemorySpace.VMEM)
    out = pl.pallas_call(
        eirnn_kernel,
        out_shape=jax.ShapeDtypeStruct((2 * SEQ_LEN, OUT_SIZE), jnp.float32),
        in_specs=[vmem, vmem],
        out_specs=vmem,
    )(x_emb, params)
    seq_out = out[:SEQ_LEN]                       # (T, N_out) layer_output
    softmax_out = out[SEQ_LEN:SEQ_LEN + 1, :2]    # (1, 2)
    return seq_out, softmax_out


# ---- pure-JAX reference (mirrors the PyTorch forward) -----------------------
def eirnn_forward_ref(x_emb, w_in, w_rec_plus, d_sign, w_out, mlp_w, mlp_b):
    state = jnp.zeros((BATCH, HIDDEN), jnp.float32)
    w_rec = w_rec_plus * d_sign
    outs = []
    for t in range(x_emb.shape[0]):
        rect_prev = jnp.maximum(state, 0.0)
        hidden_w = rect_prev @ w_rec
        input_w = w_in @ x_emb[t]                       # torch.mv(w_in, x)
        state = ((1.0 - ALPHA) * state
                 + ALPHA * (hidden_w + input_w[None, :])
                 + NOISE)
        outs.append(jnp.maximum(state, 0.0) @ w_out)
    seq_out = jnp.concatenate(outs, axis=0)             # (T, N_out) layer_output
    flat = outs[-1].reshape(-1)                         # .view(max_time*num_layers)
    out2sig = flat @ mlp_w.T + mlp_b                    # nn.Linear
    sm = jax.nn.softmax(out2sig, axis=0)                # Softmax(dim=0)
    return seq_out, jnp.stack([sm], 0)                  # ((T, N_out), (1, 2))


if __name__ == "__main__":
    key = jax.random.PRNGKey(0)
    k_emb, k_win, k_wrec, k_wout, k_mlpw, k_mlpb, k_tok = jax.random.split(key, 7)

    # Parameters (deterministic, matching __init__ shapes; rectify() applied
    # to w_in / w_rec_plus / w_out as in EIRnnCell.__init__).
    embedding = jax.random.normal(k_emb, (VOCAB, EMB_DIM), jnp.float32)
    w_in = jnp.maximum(jax.random.normal(k_win, (HIDDEN, EMB_DIM), jnp.float32), 0.0)
    w_rec_plus = jnp.maximum(jax.random.normal(k_wrec, (HIDDEN, HIDDEN), jnp.float32), 0.0)
    w_out = jnp.maximum(jax.random.normal(k_wout, (HIDDEN, OUT_SIZE), jnp.float32), 0.0)
    # d_rec diagonal: +1 for the first 80% of units (excitatory), -1 otherwise
    d_sign = jnp.where(jnp.arange(HIDDEN) < 0.8 * HIDDEN, 1.0, -1.0
                       ).astype(jnp.float32).reshape(1, HIDDEN)
    # nn.Linear(output_size * num_layers, 2) default init
    fan_in = OUT_SIZE * NUM_LAYERS
    bound = 1.0 / math.sqrt(fan_in)
    mlp_w = jax.random.uniform(k_mlpw, (2, fan_in), jnp.float32, -bound, bound)
    mlp_b = jax.random.uniform(k_mlpb, (2,), jnp.float32, -bound, bound)

    # Input: a sequence of token ids (the PyTorch forward embeds them);
    # embedding lookup is glue and stays in plain JAX.
    tokens = jax.random.randint(k_tok, (SEQ_LEN,), 0, VOCAB)
    x_emb = embedding[tokens]                            # (T, EMB_DIM)

    # One-time parameter packing (transposes / ALPHA / d_sign folded here,
    # outside the per-call hot path).
    params = prepare_params(w_in, w_rec_plus, d_sign, w_out, mlp_w, mlp_b)
    params = jax.block_until_ready(params)

    # TODO(synk): nn.Dropout between layers is identity in eval / p=0 and is
    # not applied (layers>1 would also need hidden_size == embedding_dim).
    # TODO(synk): real throughput gains would come from batching independent
    # sequences onto the matmul M dimension (B multiple of 128/256) and, on
    # v7x, sharding that batch over the two TensorCores; the module's forward
    # is batch_size=1, so the kernel keeps that shape and only optimizes the
    # per-step critical path + kernel-entry fixed costs.

    seq_out, softmax_out = eirnn_forward_pallas(x_emb, params)
    jax.block_until_ready(seq_out)
    jax.block_until_ready(softmax_out)

    ref_seq, ref_sm = eirnn_forward_ref(
        x_emb, w_in, w_rec_plus, d_sign, w_out, mlp_w, mlp_b)

    assert seq_out.shape == (SEQ_LEN, OUT_SIZE)
    assert softmax_out.shape == (1, 2)
    assert jnp.allclose(seq_out, ref_seq, atol=1e-5, rtol=1e-4), (seq_out, ref_seq)
    assert jnp.allclose(softmax_out, ref_sm, atol=1e-5, rtol=1e-4), (softmax_out, ref_sm)

    print("KERNEL_OK")
</pallas_src>

<mosaic_0001>
module attributes {stable_mosaic.version = 11 : i64} {
  func.func @eirnn_kernel(%arg0: memref<8x16xf32, #tpu.memory_space<vmem>>, %arg1: memref<96x32xf32, #tpu.memory_space<vmem>>, %arg2: memref<16x8xf32, #tpu.memory_space<vmem>>) attributes {dimension_semantics = [], scalar_prefetch = 0 : i64, scratch_operands = 0 : i64, tpu.core_type = #tpu.core_type<tc>} {
    %c0 = arith.constant 0 : index
    %c0_0 = arith.constant 0 : index
    %0 = vector.load %arg1[%c0, %c0_0] : memref<96x32xf32, #tpu.memory_space<vmem>>, vector<16x32xf32>
    %c16 = arith.constant 16 : index
    %c0_1 = arith.constant 0 : index
    %1 = vector.load %arg1[%c16, %c0_1] : memref<96x32xf32, #tpu.memory_space<vmem>>, vector<32x32xf32>
    %c48 = arith.constant 48 : index
    %c0_2 = arith.constant 0 : index
    %2 = vector.load %arg1[%c48, %c0_2] : memref<96x32xf32, #tpu.memory_space<vmem>>, vector<32x8xf32>
    %c80 = arith.constant 80 : index
    %c0_3 = arith.constant 0 : index
    %3 = vector.load %arg1[%c80, %c0_3] : memref<96x32xf32, #tpu.memory_space<vmem>>, vector<8x2xf32>
    %c88 = arith.constant 88 : index
    %c0_4 = arith.constant 0 : index
    %4 = vector.load %arg1[%c88, %c0_4] : memref<96x32xf32, #tpu.memory_space<vmem>>, vector<1x2xf32>
    %c0_5 = arith.constant 0 : index
    %c0_6 = arith.constant 0 : index
    %5 = vector.load %arg0[%c0_5, %c0_6] : memref<8x16xf32, #tpu.memory_space<vmem>>, vector<8x16xf32>
    %cst = arith.constant dense<0.000000e+00> : vector<8x32xf32>
    %6 = tpu.matmul %5, %0, %cst {dimension_numbers = #tpu.dot_dimension_numbers<[1], [0], [0], [1], [0, 0, 1, 1], [], []>} : vector<8x16xf32>, vector<16x32xf32>, vector<8x32xf32> -> vector<8x32xf32>
    %cst_7 = arith.constant 1.41421356E-6 : f32
    %7 = vector.broadcast %cst_7 : f32 to vector<8x32xf32>
    %8 = arith.addf %6, %7 : vector<8x32xf32>
    %cst_8 = arith.constant 0.000000e+00 : f32
    %9 = vector.broadcast %cst_8 : f32 to vector<1x32xf32>
    %cst_9 = arith.constant 0.000000e+00 : f32
    %10 = vector.broadcast %cst_9 : f32 to vector<1x32xf32>
    %11 = arith.maximumf %9, %10 : vector<1x32xf32>
    %cst_10 = arith.constant 9.990000e-01 : f32
    %12 = vector.broadcast %cst_10 : f32 to vector<1x32xf32>
    %13 = arith.mulf %12, %9 : vector<1x32xf32>
    %cst_11 = arith.constant dense<0.000000e+00> : vector<1x32xf32>
    %14 = tpu.matmul %11, %1, %cst_11 {dimension_numbers = #tpu.dot_dimension_numbers<[1], [0], [0], [1], [0, 0, 1, 1], [], []>} : vector<1x32xf32>, vector<32x32xf32>, vector<1x32xf32> -> vector<1x32xf32>
    %15 = arith.addf %13, %14 : vector<1x32xf32>
    %16 = vector.extract_strided_slice %8 {offsets = [0, 0], sizes = [1, 32], strides = [1, 1]} : vector<8x32xf32> to vector<1x32xf32>
    %17 = arith.addf %15, %16 : vector<1x32xf32>
    %cst_12 = arith.constant 0.000000e+00 : f32
    %18 = vector.broadcast %cst_12 : f32 to vector<1x32xf32>
    %19 = arith.maximumf %17, %18 : vector<1x32xf32>
    %cst_13 = arith.constant 0.000000e+00 : f32
    %20 = vector.broadcast %cst_13 : f32 to vector<1x32xf32>
    %21 = arith.maximumf %17, %20 : vector<1x32xf32>
    %cst_14 = arith.constant 9.990000e-01 : f32
    %22 = vector.broadcast %cst_14 : f32 to vector<1x32xf32>
    %23 = arith.mulf %22, %17 : vector<1x32xf32>
    %cst_15 = arith.constant dense<0.000000e+00> : vector<1x32xf32>
    %24 = tpu.matmul %21, %1, %cst_15 {dimension_numbers = #tpu.dot_dimension_numbers<[1], [0], [0], [1], [0, 0, 1, 1], [], []>} : vector<1x32xf32>, vector<32x32xf32>, vector<1x32xf32> -> vector<1x32xf32>
    %25 = arith.addf %23, %24 : vector<1x32xf32>
    %26 = vector.extract_strided_slice %8 {offsets = [1, 0], sizes = [1, 32], strides = [1, 1]} : vector<8x32xf32> to vector<1x32xf32>
    %27 = arith.addf %25, %26 : vector<1x32xf32>
    %cst_16 = arith.constant 0.000000e+00 : f32
    %28 = vector.broadcast %cst_16 : f32 to vector<1x32xf32>
    %29 = arith.maximumf %27, %28 : vector<1x32xf32>
    %cst_17 = arith.constant 0.000000e+00 : f32
    %30 = vector.broadcast %cst_17 : f32 to vector<1x32xf32>
    %31 = arith.maximumf %27, %30 : vector<1x32xf32>
    %cst_18 = arith.constant 9.990000e-01 : f32
    %32 = vector.broadcast %cst_18 : f32 to vector<1x32xf32>
    %33 = arith.mulf %32, %27 : vector<1x32xf32>
    %cst_19 = arith.constant dense<0.000000e+00> : vector<1x32xf32>
    %34 = tpu.matmul %31, %1, %cst_19 {dimension_numbers = #tpu.dot_dimension_numbers<[1], [0], [0], [1], [0, 0, 1, 1], [], []>} : vector<1x32xf32>, vector<32x32xf32>, vector<1x32xf32> -> vector<1x32xf32>
    %35 = arith.addf %33, %34 : vector<1x32xf32>
    %36 = vector.extract_strided_slice %8 {offsets = [2, 0], sizes = [1, 32], strides = [1, 1]} : vector<8x32xf32> to vector<1x32xf32>
    %37 = arith.addf %35, %36 : vector<1x32xf32>
    %cst_20 = arith.constant 0.000000e+00 : f32
    %38 = vector.broadcast %cst_20 : f32 to vector<1x32xf32>
    %39 = arith.maximumf %37, %38 : vector<1x32xf32>
    %cst_21 = arith.constant 0.000000e+00 : f32
    %40 = vector.broadcast %cst_21 : f32 to vector<1x32xf32>
    %41 = arith.maximumf %37, %40 : vector<1x32xf32>
    %cst_22 = arith.constant 9.990000e-01 : f32
    %42 = vector.broadcast %cst_22 : f32 to vector<1x32xf32>
    %43 = arith.mulf %42, %37 : vector<1x32xf32>
    %cst_23 = arith.constant dense<0.000000e+00> : vector<1x32xf32>
    %44 = tpu.matmul %41, %1, %cst_23 {dimension_numbers = #tpu.dot_dimension_numbers<[1], [0], [0], [1], [0, 0, 1, 1], [], []>} : vector<1x32xf32>, vector<32x32xf32>, vector<1x32xf32> -> vector<1x32xf32>
    %45 = arith.addf %43, %44 : vector<1x32xf32>
    %46 = vector.extract_strided_slice %8 {offsets = [3, 0], sizes = [1, 32], strides = [1, 1]} : vector<8x32xf32> to vector<1x32xf32>
    %47 = arith.addf %45, %46 : vector<1x32xf32>
    %cst_24 = arith.constant 0.000000e+00 : f32
    %48 = vector.broadcast %cst_24 : f32 to vector<1x32xf32>
    %49 = arith.maximumf %47, %48 : vector<1x32xf32>
    %cst_25 = arith.constant 0.000000e+00 : f32
    %50 = vector.broadcast %cst_25 : f32 to vector<1x32xf32>
    %51 = arith.maximumf %47, %50 : vector<1x32xf32>
    %cst_26 = arith.constant 9.990000e-01 : f32
    %52 = vector.broadcast %cst_26 : f32 to vector<1x32xf32>
    %53 = arith.mulf %52, %47 : vector<1x32xf32>
    %cst_27 = arith.constant dense<0.000000e+00> : vector<1x32xf32>
    %54 = tpu.matmul %51, %1, %cst_27 {dimension_numbers = #tpu.dot_dimension_numbers<[1], [0], [0], [1], [0, 0, 1, 1], [], []>} : vector<1x32xf32>, vector<32x32xf32>, vector<1x32xf32> -> vector<1x32xf32>
    %55 = arith.addf %53, %54 : vector<1x32xf32>
    %56 = vector.extract_strided_slice %8 {offsets = [4, 0], sizes = [1, 32], strides = [1, 1]} : vector<8x32xf32> to vector<1x32xf32>
    %57 = arith.addf %55, %56 : vector<1x32xf32>
    %cst_28 = arith.constant 0.000000e+00 : f32
    %58 = vector.broadcast %cst_28 : f32 to vector<1x32xf32>
    %59 = arith.maximumf %57, %58 : vector<1x32xf32>
    %cst_29 = arith.constant 0.000000e+00 : f32
    %60 = vector.broadcast %cst_29 : f32 to vector<1x32xf32>
    %61 = arith.maximumf %57, %60 : vector<1x32xf32>
    %cst_30 = arith.constant 9.990000e-01 : f32
    %62 = vector.broadcast %cst_30 : f32 to vector<1x32xf32>
    %63 = arith.mulf %62, %57 : vector<1x32xf32>
    %cst_31 = arith.constant dense<0.000000e+00> : vector<1x32xf32>
    %64 = tpu.matmul %61, %1, %cst_31 {dimension_numbers = #tpu.dot_dimension_numbers<[1], [0], [0], [1], [0, 0, 1, 1], [], []>} : vector<1x32xf32>, vector<32x32xf32>, vector<1x32xf32> -> vector<1x32xf32>
    %65 = arith.addf %63, %64 : vector<1x32xf32>
    %66 = vector.extract_strided_slice %8 {offsets = [5, 0], sizes = [1, 32], strides = [1, 1]} : vector<8x32xf32> to vector<1x32xf32>
    %67 = arith.addf %65, %66 : vector<1x32xf32>
    %cst_32 = arith.constant 0.000000e+00 : f32
    %68 = vector.broadcast %cst_32 : f32 to vector<1x32xf32>
    %69 = arith.maximumf %67, %68 : vector<1x32xf32>
    %cst_33 = arith.constant 0.000000e+00 : f32
    %70 = vector.broadcast %cst_33 : f32 to vector<1x32xf32>
    %71 = arith.maximumf %67, %70 : vector<1x32xf32>
    %cst_34 = arith.constant 9.990000e-01 : f32
    %72 = vector.broadcast %cst_34 : f32 to vector<1x32xf32>
    %73 = arith.mulf %72, %67 : vector<1x32xf32>
    %cst_35 = arith.constant dense<0.000000e+00> : vector<1x32xf32>
    %74 = tpu.matmul %71, %1, %cst_35 {dimension_numbers = #tpu.dot_dimension_numbers<[1], [0], [0], [1], [0, 0, 1, 1], [], []>} : vector<1x32xf32>, vector<32x32xf32>, vector<1x32xf32> -> vector<1x32xf32>
    %75 = arith.addf %73, %74 : vector<1x32xf32>
    %76 = vector.extract_strided_slice %8 {offsets = [6, 0], sizes = [1, 32], strides = [1, 1]} : vector<8x32xf32> to vector<1x32xf32>
    %77 = arith.addf %75, %76 : vector<1x32xf32>
    %cst_36 = arith.constant 0.000000e+00 : f32
    %78 = vector.broadcast %cst_36 : f32 to vector<1x32xf32>
    %79 = arith.maximumf %77, %78 : vector<1x32xf32>
    %cst_37 = arith.constant 0.000000e+00 : f32
    %80 = vector.broadcast %cst_37 : f32 to vector<1x32xf32>
    %81 = arith.maximumf %77, %80 : vector<1x32xf32>
    %cst_38 = arith.constant 9.990000e-01 : f32
    %82 = vector.broadcast %cst_38 : f32 to vector<1x32xf32>
    %83 = arith.mulf %82, %77 : vector<1x32xf32>
    %cst_39 = arith.constant dense<0.000000e+00> : vector<1x32xf32>
    %84 = tpu.matmul %81, %1, %cst_39 {dimension_numbers = #tpu.dot_dimension_numbers<[1], [0], [0], [1], [0, 0, 1, 1], [], []>} : vector<1x32xf32>, vector<32x32xf32>, vector<1x32xf32> -> vector<1x32xf32>
    %85 = arith.addf %83, %84 : vector<1x32xf32>
    %86 = vector.extract_strided_slice %8 {offsets = [7, 0], sizes = [1, 32], strides = [1, 1]} : vector<8x32xf32> to vector<1x32xf32>
    %87 = arith.addf %85, %86 : vector<1x32xf32>
    %cst_40 = arith.constant 0.000000e+00 : f32
    %88 = vector.broadcast %cst_40 : f32 to vector<1x32xf32>
    %89 = arith.maximumf %87, %88 : vector<1x32xf32>
    %90 = tpu.concatenate %19, %29, %39, %49, %59, %69, %79, %89 in 0 : vector<1x32xf32>, vector<1x32xf32>, vector<1x32xf32>, vector<1x32xf32>, vector<1x32xf32>, vector<1x32xf32>, vector<1x32xf32>, vector<1x32xf32> -> vector<8x32xf32>
    %cst_41 = arith.constant dense<0.000000e+00> : vector<8x8xf32>
    %91 = tpu.matmul %90, %2, %cst_41 {dimension_numbers = #tpu.dot_dimension_numbers<[1], [0], [0], [1], [0, 0, 1, 1], [], []>} : vector<8x32xf32>, vector<32x8xf32>, vector<8x8xf32> -> vector<8x8xf32>
    %92 = vector.extract_strided_slice %91 {offsets = [7, 0], sizes = [1, 8], strides = [1, 1]} : vector<8x8xf32> to vector<1x8xf32>
    %cst_42 = arith.constant dense<0.000000e+00> : vector<1x2xf32>
    %93 = tpu.matmul %92, %3, %cst_42 {dimension_numbers = #tpu.dot_dimension_numbers<[1], [0], [0], [1], [0, 0, 1, 1], [], []>} : vector<1x8xf32>, vector<8x2xf32>, vector<1x2xf32> -> vector<1x2xf32>
    %94 = arith.addf %93, %4 : vector<1x2xf32>
    %cst_43 = arith.constant dense<0xFF800000> : vector<1xf32>
    %95 = vector.multi_reduction <maximumf>, %94, %cst_43 [1] : vector<1x2xf32> to vector<1xf32>
    %96 = vector.shape_cast %95 : vector<1xf32> to vector<1x1xf32>
    %97 = vector.broadcast %96 : vector<1x1xf32> to vector<1x2xf32>
    %98 = arith.subf %94, %97 : vector<1x2xf32>
    %99 = math.exp %98 : vector<1x2xf32>
    %cst_44 = arith.constant dense<0.000000e+00> : vector<1xf32>
    %100 = vector.multi_reduction <add>, %99, %cst_44 [1] : vector<1x2xf32> to vector<1xf32>
    %101 = vector.shape_cast %100 : vector<1xf32> to vector<1x1xf32>
    %102 = vector.broadcast %101 : vector<1x1xf32> to vector<1x2xf32>
    %103 = arith.divf %99, %102 : vector<1x2xf32>
    %cst_45 = arith.constant 0.000000e+00 : f32
    %104 = vector.broadcast %cst_45 : f32 to vector<1x6xf32>
    %105 = tpu.concatenate %103, %104 in 1 : vector<1x2xf32>, vector<1x6xf32> -> vector<1x8xf32>
    %cst_46 = arith.constant 0.000000e+00 : f32
    %106 = vector.broadcast %cst_46 : f32 to vector<7x8xf32>
    %107 = tpu.concatenate %91, %105, %106 in 0 : vector<8x8xf32>, vector<1x8xf32>, vector<7x8xf32> -> vector<16x8xf32>
    %c0_47 = arith.constant 0 : index
    %c0_48 = arith.constant 0 : index
    %108 = vector.load %arg2[%c0_47, %c0_48] : memref<16x8xf32, #tpu.memory_space<vmem>>, vector<16x8xf32>
    tpu.vector_store %arg2[%c0_47, %c0_48], %107 {strides = array<i32>} : memref<16x8xf32, #tpu.memory_space<vmem>>, vector<16x8xf32>,
    return
  }
}

</mosaic_0001>

<llo_original>
// kernel: eirnn_forward_pallas.1
$region0: #{eirnn_forward_pallas.1}
  #allocation0 [shape = 'u32[]', space=smem, size = 0x4, offset = 0x4, fixed_abs, tag = 'smem constant byte address 0x4 - core index']
  #allocation1 [shape = 'u32[144,128]{1,0:T(1,128)}', space=vmem, size = 0x12000, scoped, tag = 'internal scratch']
  %s0 = inlined_call_operand.vmem [shape: f32[8,16], index: 0, kind: input, shape index: {}]
  %s1 = inlined_call_operand.vmem [shape: f32[96,32], index: 1, kind: input, shape index: {}]
  %s2 = inlined_call_operand.vmem [shape: f32[16,8], index: 2, kind: output, shape index: {}]
  %s3 = sld [smem:[#allocation0]]
  $region18: #{eirnn_forward_pallas.1} parent=0
    _
  %s5 = ssub.s32 1, %s3
  %s6 = scalar_select 0, %s5, %s3
  // Predicated region
  $region2: #{eirnn_forward_pallas.1} parent=0 // pred_check
    _
  $region3: #{eirnn_forward_pallas.1} parent=0 // pred_check_branch
    %8 = sbr.rel (0) target = $region5
  $region4: #{eirnn_forward_pallas.1} parent=0 // pred_region
    _
  $region5: #{eirnn_forward_pallas.1} parent=0 // pred_fallthru
    _
  // Predicated region
  $region6: #{eirnn_forward_pallas.1} parent=0 // pred_check
    _
  $region7: #{eirnn_forward_pallas.1} parent=0 // pred_check_branch
    %10 = sbr.rel (0) target = $region9
  $region8: #{eirnn_forward_pallas.1} parent=0 // pred_region
    _
  $region9: #{eirnn_forward_pallas.1} parent=0 // pred_fallthru
    _
  %v11 = vld [vmem:[%s1] sm:$0xff]
  %v12 = vld [vmem:[%s1 + $0x8] sm:$0xff]
  %v13 = vld [vmem:[%s1 + $0x10] sm:$0xff]
  %v14 = vld [vmem:[%s1 + $0x18] sm:$0xff]
  %v15 = vld [vmem:[%s1 + $0x20] sm:$0xff]
  %v16 = vld [vmem:[%s1 + $0x28] sm:$0xff]
  %v17 = vld [vmem:[%s1 + $0x30] sm:$0xff]
  %v18 = vld [vmem:[%s1 + $0x38] sm:$0xff]
  %v19 = vld [vmem:[%s1 + $0x40] sm:$0xff]
  %v20 = vld [vmem:[%s1 + $0x48] sm:$0xff]
  %v21 = vld [vmem:[%s1 + $0x50] sm:$0xff]
  %v22 = vld [vmem:[%s1 + $0x58] sm:$0x1]
  %v23 = vld [vmem:[%s0] sm:$0xff]
  %vm24 = vcmask 130048
  %v26 = vsel %vm24, %v23, 0
  %28 = vmatprep.subr.mxu0 0.0
  %29 = vmatpush1.msra.mxu0 %v11
  %30 = vmatprep.subr.mxu0 0.0
  %31 = vmatpush1.msra.mxu0 %v12
  %32 = vmatprep.subr.mxu0 0.0
  %33 = vmatpush1.msra.mxu0 0.0
  %34 = vmatprep.subr.mxu0 0.0
  %35 = vmatpush1.msra.mxu0 0.0
  %36 = vmatprep.subr.mxu0 0.0
  %37 = vmatpush1.msra.mxu0 0.0
  %38 = vmatprep.subr.mxu0 0.0
  %39 = vmatpush1.msra.mxu0 0.0
  %40 = vmatprep.subr.mxu0 0.0
  %41 = vmatpush1.msra.mxu0 0.0
  %42 = vmatprep.subr.mxu0 0.0
  %43 = vmatpush1.msra.mxu0 0.0
  %44 = vmatprep.subr.mxu0 0.0
  %45 = vmatpush1.msra.mxu0 0.0
  %46 = vmatprep.subr.mxu0 0.0
  %47 = vmatpush1.msra.mxu0 0.0
  %48 = vmatprep.subr.mxu0 0.0
  %49 = vmatpush1.msra.mxu0 0.0
  %50 = vmatprep.subr.mxu0 0.0
  %51 = vmatpush1.msra.mxu0 0.0
  %52 = vmatprep.subr.mxu0 0.0
  %53 = vmatpush1.msra.mxu0 0.0
  %54 = vmatprep.subr.mxu0 0.0
  %55 = vmatpush1.msra.mxu0 0.0
  %56 = vmatprep.subr.mxu0 0.0
  %57 = vmatpush1.msra.mxu0 0.0
  %58 = vmatprep.subr.mxu0 0.0
  %59 = vmatpush1.msra.mxu0 0.0
  %60 = vmatprep.subr.mxu0 0.0
  %61 = vmatpush1.msra.mxu0 0.0
  %62 = vmatprep.subr.mxu0 0.0
  %63 = vmatpush1.msra.mxu0 0.0
  %64 = vmatprep.subr.mxu0 0.0
  %65 = vmatpush1.msra.mxu0 0.0
  %66 = vmatprep.subr.mxu0 0.0
  %67 = vmatpush1.msra.mxu0 0.0
  %68 = vmatprep.subr.mxu0 0.0
  %69 = vmatpush1.msra.mxu0 0.0
  %70 = vmatprep.subr.mxu0 0.0
  %71 = vmatpush1.msra.mxu0 0.0
  %72 = vmatprep.subr.mxu0 0.0
  %73 = vmatpush1.msra.mxu0 0.0
  %74 = vmatprep.subr.mxu0 0.0
  %75 = vmatpush1.msra.mxu0 0.0
  %76 = vmatprep.subr.mxu0 0.0
  %77 = vmatpush1.msra.mxu0 0.0
  %78 = vmatprep.subr.mxu0 0.0
  %79 = vmatpush1.msra.mxu0 0.0
  %80 = vmatprep.subr.mxu0 0.0
  %81 = vmatpush1.msra.mxu0 0.0
  %82 = vmatprep.subr.mxu0 0.0
  %83 = vmatpush1.msra.mxu0 0.0
  %84 = vmatprep.subr.mxu0 0.0
  %85 = vmatpush1.msra.mxu0 0.0
  %86 = vmatprep.subr.mxu0 0.0
  %87 = vmatpush1.msra.mxu0 0.0
  %88 = vmatprep.subr.mxu0 0.0
  %89 = vmatpush1.msra.mxu0 0.0
  %90 = vmatprep.subr.mxu0 0.0
  %91 = vmatpush1.msra.mxu0 0.0
  %92 = vmatprep.mubr.f32.mxu0 0.0
  %93 = vmatmul.mubr.f32.gmra.mrb[0].mxu0 %v26
  %v94 = vpop.f32.mrb[0].mxu0
  %v95 = vadd.f32 1.4142136e-06, %v94
  %v96 = vpop.f32.mrb[0].mxu0
  %97 = vdwg.mxu0
  %vm98 = vcmask 261120
  %v100 = vsel %vm98, 0.0, 0
  %102 = vmatprep.subr.mxu0 0.0
  %103 = vmatpush1.msra.mxu0 %v13
  %104 = vmatprep.subr.mxu0 0.0
  %105 = vmatpush1.msra.mxu0 %v14
  %106 = vmatprep.subr.mxu0 0.0
  %107 = vmatpush1.msra.mxu0 %v15
  %108 = vmatprep.subr.mxu0 0.0
  %109 = vmatpush1.msra.mxu0 %v16
  %110 = vmatprep.subr.mxu0 0.0
  %111 = vmatpush1.msra.mxu0 0.0
  %112 = vmatprep.subr.mxu0 0.0
  %113 = vmatpush1.msra.mxu0 0.0
  %114 = vmatprep.subr.mxu0 0.0
  %115 = vmatpush1.msra.mxu0 0.0
  %116 = vmatprep.subr.mxu0 0.0
  %117 = vmatpush1.msra.mxu0 0.0
  %118 = vmatprep.subr.mxu0 0.0
  %119 = vmatpush1.msra.mxu0 0.0
  %120 = vmatprep.subr.mxu0 0.0
  %121 = vmatpush1.msra.mxu0 0.0
  %122 = vmatprep.subr.mxu0 0.0
  %123 = vmatpush1.msra.mxu0 0.0
  %124 = vmatprep.subr.mxu0 0.0
  %125 = vmatpush1.msra.mxu0 0.0
  %126 = vmatprep.subr.mxu0 0.0
  %127 = vmatpush1.msra.mxu0 0.0
  %128 = vmatprep.subr.mxu0 0.0
  %129 = vmatpush1.msra.mxu0 0.0
  %130 = vmatprep.subr.mxu0 0.0
  %131 = vmatpush1.msra.mxu0 0.0
  %132 = vmatprep.subr.mxu0 0.0
  %133 = vmatpush1.msra.mxu0 0.0
  %134 = vmatprep.subr.mxu0 0.0
  %135 = vmatpush1.msra.mxu0 0.0
  %136 = vmatprep.subr.mxu0 0.0
  %137 = vmatpush1.msra.mxu0 0.0
  %138 = vmatprep.subr.mxu0 0.0
  %139 = vmatpush1.msra.mxu0 0.0
  %140 = vmatprep.subr.mxu0 0.0
  %141 = vmatpush1.msra.mxu0 0.0
  %142 = vmatprep.subr.mxu0 0.0
  %143 = vmatpush1.msra.mxu0 0.0
  %144 = vmatprep.subr.mxu0 0.0
  %145 = vmatpush1.msra.mxu0 0.0
  %146 = vmatprep.subr.mxu0 0.0
  %147 = vmatpush1.msra.mxu0 0.0
  %148 = vmatprep.subr.mxu0 0.0
  %149 = vmatpush1.msra.mxu0 0.0
  %150 = vmatprep.subr.mxu0 0.0
  %151 = vmatpush1.msra.mxu0 0.0
  %152 = vmatprep.subr.mxu0 0.0
  %153 = vmatpush1.msra.mxu0 0.0
  %154 = vmatprep.subr.mxu0 0.0
  %155 = vmatpush1.msra.mxu0 0.0
  %156 = vmatprep.subr.mxu0 0.0
  %157 = vmatpush1.msra.mxu0 0.0
  %158 = vmatprep.subr.mxu0 0.0
  %159 = vmatpush1.msra.mxu0 0.0
  %160 = vmatprep.subr.mxu0 0.0
  %161 = vmatpush1.msra.mxu0 0.0
  %162 = vmatprep.subr.mxu0 0.0
  %163 = vmatpush1.msra.mxu0 0.0
  %164 = vmatprep.subr.mxu0 0.0
  %165 = vmatpush1.msra.mxu0 0.0
  %166 = vmatprep.mubr.f32.mxu0 0.0
  %167 = vmatmul.mubr.f32.gmra.mrb[0].mxu0 %v100
  %v168 = vpop.f32.mrb[0].mxu0
  %v169 = vadd.f32 %v95, %v168
  %v170 = vpop.f32.mrb[0].mxu0
  %171 = vdwg.mxu0
  %v172 = vmax.f32 %v169, 0.0
  %v173 = vmul.f32 %v169, 0.999
  %v175 = vsel %vm98, %v172, 0
  %177 = vmatprep.subr.mxu0 0.0
  %178 = vmatpush1.msra.mxu0 %v13
  %179 = vmatprep.subr.mxu0 0.0
  %180 = vmatpush1.msra.mxu0 %v14
  %181 = vmatprep.subr.mxu0 0.0
  %182 = vmatpush1.msra.mxu0 %v15
  %183 = vmatprep.subr.mxu0 0.0
  %184 = vmatpush1.msra.mxu0 %v16
  %185 = vmatprep.subr.mxu0 0.0
  %186 = vmatpush1.msra.mxu0 0.0
  %187 = vmatprep.subr.mxu0 0.0
  %188 = vmatpush1.msra.mxu0 0.0
  %189 = vmatprep.subr.mxu0 0.0
  %190 = vmatpush1.msra.mxu0 0.0
  %191 = vmatprep.subr.mxu0 0.0
  %192 = vmatpush1.msra.mxu0 0.0
  %193 = vmatprep.subr.mxu0 0.0
  %194 = vmatpush1.msra.mxu0 0.0
  %195 = vmatprep.subr.mxu0 0.0
  %196 = vmatpush1.msra.mxu0 0.0
  %197 = vmatprep.subr.mxu0 0.0
  %198 = vmatpush1.msra.mxu0 0.0
  %199 = vmatprep.subr.mxu0 0.0
  %200 = vmatpush1.msra.mxu0 0.0
  %201 = vmatprep.subr.mxu0 0.0
  %202 = vmatpush1.msra.mxu0 0.0
  %203 = vmatprep.subr.mxu0 0.0
  %204 = vmatpush1.msra.mxu0 0.0
  %205 = vmatprep.subr.mxu0 0.0
  %206 = vmatpush1.msra.mxu0 0.0
  %207 = vmatprep.subr.mxu0 0.0
  %208 = vmatpush1.msra.mxu0 0.0
  %209 = vmatprep.subr.mxu0 0.0
  %210 = vmatpush1.msra.mxu0 0.0
  %211 = vmatprep.subr.mxu0 0.0
  %212 = vmatpush1.msra.mxu0 0.0
  %213 = vmatprep.subr.mxu0 0.0
  %214 = vmatpush1.msra.mxu0 0.0
  %215 = vmatprep.subr.mxu0 0.0
  %216 = vmatpush1.msra.mxu0 0.0
  %217 = vmatprep.subr.mxu0 0.0
  %218 = vmatpush1.msra.mxu0 0.0
  %219 = vmatprep.subr.mxu0 0.0
  %220 = vmatpush1.msra.mxu0 0.0
  %221 = vmatprep.subr.mxu0 0.0
  %222 = vmatpush1.msra.mxu0 0.0
  %223 = vmatprep.subr.mxu0 0.0
  %224 = vmatpush1.msra.mxu0 0.0
  %225 = vmatprep.subr.mxu0 0.0
  %226 = vmatpush1.msra.mxu0 0.0
  %227 = vmatprep.subr.mxu0 0.0
  %228 = vmatpush1.msra.mxu0 0.0
  %229 = vmatprep.subr.mxu0 0.0
  %230 = vmatpush1.msra.mxu0 0.0
  %231 = vmatprep.subr.mxu0 0.0
  %232 = vmatpush1.msra.mxu0 0.0
  %233 = vmatprep.subr.mxu0 0.0
  %234 = vmatpush1.msra.mxu0 0.0
  %235 = vmatprep.subr.mxu0 0.0
  %236 = vmatpush1.msra.mxu0 0.0
  %237 = vmatprep.subr.mxu0 0.0
  %238 = vmatpush1.msra.mxu0 0.0
  %239 = vmatprep.subr.mxu0 0.0
  %240 = vmatpush1.msra.mxu0 0.0
  %241 = vmatprep.mubr.f32.mxu0 0.0
  %242 = vmatmul.mubr.f32.gmra.mrb[0].mxu0 %v175
  %v243 = vpop.f32.mrb[0].mxu0
  %v244 = vadd.f32 0.0, %v243
  %v245 = vpop.f32.mrb[0].mxu0
  %246 = vdwg.mxu0
  %v247 = vadd.f32 %v173, %v244
  %v249 = vrot.slane %v95, 1
  %v251 = vadd.f32 %v247, %v249
  %v252 = vmax.f32 %v251, 0.0
  %v253 = vmul.f32 %v251, 0.999
  %v255 = vsel %vm98, %v252, 0
  %257 = vmatprep.subr.mxu0 0.0
  %258 = vmatpush1.msra.mxu0 %v13
  %259 = vmatprep.subr.mxu0 0.0
  %260 = vmatpush1.msra.mxu0 %v14
  %261 = vmatprep.subr.mxu0 0.0
  %262 = vmatpush1.msra.mxu0 %v15
  %263 = vmatprep.subr.mxu0 0.0
  %264 = vmatpush1.msra.mxu0 %v16
  %265 = vmatprep.subr.mxu0 0.0
  %266 = vmatpush1.msra.mxu0 0.0
  %267 = vmatprep.subr.mxu0 0.0
  %268 = vmatpush1.msra.mxu0 0.0
  %269 = vmatprep.subr.mxu0 0.0
  %270 = vmatpush1.msra.mxu0 0.0
  %271 = vmatprep.subr.mxu0 0.0
  %272 = vmatpush1.msra.mxu0 0.0
  %273 = vmatprep.subr.mxu0 0.0
  %274 = vmatpush1.msra.mxu0 0.0
  %275 = vmatprep.subr.mxu0 0.0
  %276 = vmatpush1.msra.mxu0 0.0
  %277 = vmatprep.subr.mxu0 0.0
  %278 = vmatpush1.msra.mxu0 0.0
  %279 = vmatprep.subr.mxu0 0.0
  %280 = vmatpush1.msra.mxu0 0.0
  %281 = vmatprep.subr.mxu0 0.0
  %282 = vmatpush1.msra.mxu0 0.0
  %283 = vmatprep.subr.mxu0 0.0
  %284 = vmatpush1.msra.mxu0 0.0
  %285 = vmatprep.subr.mxu0 0.0
  %286 = vmatpush1.msra.mxu0 0.0
  %287 = vmatprep.subr.mxu0 0.0
  %288 = vmatpush1.msra.mxu0 0.0
  %289 = vmatprep.subr.mxu0 0.0
  %290 = vmatpush1.msra.mxu0 0.0
  %291 = vmatprep.subr.mxu0 0.0
  %292 = vmatpush1.msra.mxu0 0.0
  %293 = vmatprep.subr.mxu0 0.0
  %294 = vmatpush1.msra.mxu0 0.0
  %295 = vmatprep.subr.mxu0 0.0
  %296 = vmatpush1.msra.mxu0 0.0
  %297 = vmatprep.subr.mxu0 0.0
  %298 = vmatpush1.msra.mxu0 0.0
  %299 = vmatprep.subr.mxu0 0.0
  %300 = vmatpush1.msra.mxu0 0.0
  %301 = vmatprep.subr.mxu0 0.0
  %302 = vmatpush1.msra.mxu0 0.0
  %303 = vmatprep.subr.mxu0 0.0
  %304 = vmatpush1.msra.mxu0 0.0
  %305 = vmatprep.subr.mxu0 0.0
  %306 = vmatpush1.msra.mxu0 0.0
  %307 = vmatprep.subr.mxu0 0.0
  %308 = vmatpush1.msra.mxu0 0.0
  %309 = vmatprep.subr.mxu0 0.0
  %310 = vmatpush1.msra.mxu0 0.0
  %311 = vmatprep.subr.mxu0 0.0
  %312 = vmatpush1.msra.mxu0 0.0
  %313 = vmatprep.subr.mxu0 0.0
  %314 = vmatpush1.msra.mxu0 0.0
  %315 = vmatprep.subr.mxu0 0.0
  %316 = vmatpush1.msra.mxu0 0.0
  %317 = vmatprep.subr.mxu0 0.0
  %318 = vmatpush1.msra.mxu0 0.0
  %319 = vmatprep.subr.mxu0 0.0
  %320 = vmatpush1.msra.mxu0 0.0
  %321 = vmatprep.mubr.f32.mxu0 0.0
  %322 = vmatmul.mubr.f32.gmra.mrb[0].mxu0 %v255
  %v323 = vpop.f32.mrb[0].mxu0
  %v324 = vadd.f32 0.0, %v323
  %v325 = vpop.f32.mrb[0].mxu0
  %326 = vdwg.mxu0
  %v327 = vadd.f32 %v253, %v324
  %v328 = vrot.slane %v95, 2
  %v330 = vadd.f32 %v327, %v328
  %v331 = vmax.f32 %v330, 0.0
  %v332 = vmul.f32 %v330, 0.999
  %v334 = vsel %vm98, %v331, 0
  %336 = vmatprep.subr.mxu0 0.0
  %337 = vmatpush1.msra.mxu0 %v13
  %338 = vmatprep.subr.mxu0 0.0
  %339 = vmatpush1.msra.mxu0 %v14
  %340 = vmatprep.subr.mxu0 0.0
  %341 = vmatpush1.msra.mxu0 %v15
  %342 = vmatprep.subr.mxu0 0.0
  %343 = vmatpush1.msra.mxu0 %v16
  %344 = vmatprep.subr.mxu0 0.0
  %345 = vmatpush1.msra.mxu0 0.0
  %346 = vmatprep.subr.mxu0 0.0
  %347 = vmatpush1.msra.mxu0 0.0
  %348 = vmatprep.subr.mxu0 0.0
  %349 = vmatpush1.msra.mxu0 0.0
  %350 = vmatprep.subr.mxu0 0.0
  %351 = vmatpush1.msra.mxu0 0.0
  %352 = vmatprep.subr.mxu0 0.0
  %353 = vmatpush1.msra.mxu0 0.0
  %354 = vmatprep.subr.mxu0 0.0
  %355 = vmatpush1.msra.mxu0 0.0
  %356 = vmatprep.subr.mxu0 0.0
  %357 = vmatpush1.msra.mxu0 0.0
  %358 = vmatprep.subr.mxu0 0.0
  %359 = vmatpush1.msra.mxu0 0.0
  %360 = vmatprep.subr.mxu0 0.0
  %361 = vmatpush1.msra.mxu0 0.0
  %362 = vmatprep.subr.mxu0 0.0
  %363 = vmatpush1.msra.mxu0 0.0
  %364 = vmatprep.subr.mxu0 0.0
  %365 = vmatpush1.msra.mxu0 0.0
  %366 = vmatprep.subr.mxu0 0.0
  %367 = vmatpush1.msra.mxu0 0.0
  %368 = vmatprep.subr.mxu0 0.0
  %369 = vmatpush1.msra.mxu0 0.0
  %370 = vmatprep.subr.mxu0 0.0
  %371 = vmatpush1.msra.mxu0 0.0
  %372 = vmatprep.subr.mxu0 0.0
  %373 = vmatpush1.msra.mxu0 0.0
  %374 = vmatprep.subr.mxu0 0.0
  %375 = vmatpush1.msra.mxu0 0.0
  %376 = vmatprep.subr.mxu0 0.0
  %377 = vmatpush1.msra.mxu0 0.0
  %378 = vmatprep.subr.mxu0 0.0
  %379 = vmatpush1.msra.mxu0 0.0
  %380 = vmatprep.subr.mxu0 0.0
  %381 = vmatpush1.msra.mxu0 0.0
  %382 = vmatprep.subr.mxu0 0.0
  %383 = vmatpush1.msra.mxu0 0.0
  %384 = vmatprep.subr.mxu0 0.0
  %385 = vmatpush1.msra.mxu0 0.0
  %386 = vmatprep.subr.mxu0 0.0
  %387 = vmatpush1.msra.mxu0 0.0
  %388 = vmatprep.subr.mxu0 0.0
  %389 = vmatpush1.msra.mxu0 0.0
  %390 = vmatprep.subr.mxu0 0.0
  %391 = vmatpush1.msra.mxu0 0.0
  %392 = vmatprep.subr.mxu0 0.0
  %393 = vmatpush1.msra.mxu0 0.0
  %394 = vmatprep.subr.mxu0 0.0
  %395 = vmatpush1.msra.mxu0 0.0
  %396 = vmatprep.subr.mxu0 0.0
  %397 = vmatpush1.msra.mxu0 0.0
  %398 = vmatprep.subr.mxu0 0.0
  %399 = vmatpush1.msra.mxu0 0.0
  %400 = vmatprep.mubr.f32.mxu0 0.0
  %401 = vmatmul.mubr.f32.gmra.mrb[0].mxu0 %v334
  %v402 = vpop.f32.mrb[0].mxu0
  %v403 = vadd.f32 0.0, %v402
  %v404 = vpop.f32.mrb[0].mxu0
  %405 = vdwg.mxu0
  %v406 = vadd.f32 %v332, %v403
  %v407 = vrot.slane %v95, 3
  %v409 = vadd.f32 %v406, %v407
  %v410 = vmax.f32 %v409, 0.0
  %v411 = vmul.f32 %v409, 0.999
  %v413 = vsel %vm98, %v410, 0
  %415 = vmatprep.subr.mxu0 0.0
  %416 = vmatpush1.msra.mxu0 %v13
  %417 = vmatprep.subr.mxu0 0.0
  %418 = vmatpush1.msra.mxu0 %v14
  %419 = vmatprep.subr.mxu0 0.0
  %420 = vmatpush1.msra.mxu0 %v15
  %421 = vmatprep.subr.mxu0 0.0
  %422 = vmatpush1.msra.mxu0 %v16
  %423 = vmatprep.subr.mxu0 0.0
  %424 = vmatpush1.msra.mxu0 0.0
  %425 = vmatprep.subr.mxu0 0.0
  %426 = vmatpush1.msra.mxu0 0.0
  %427 = vmatprep.subr.mxu0 0.0
  %428 = vmatpush1.msra.mxu0 0.0
  %429 = vmatprep.subr.mxu0 0.0
  %430 = vmatpush1.msra.mxu0 0.0
  %431 = vmatprep.subr.mxu0 0.0
  %432 = vmatpush1.msra.mxu0 0.0
  %433 = vmatprep.subr.mxu0 0.0
  %434 = vmatpush1.msra.mxu0 0.0
  %435 = vmatprep.subr.mxu0 0.0
  %436 = vmatpush1.msra.mxu0 0.0
  %437 = vmatprep.subr.mxu0 0.0
  %438 = vmatpush1.msra.mxu0 0.0
  %439 = vmatprep.subr.mxu0 0.0
  %440 = vmatpush1.msra.mxu0 0.0
  %441 = vmatprep.subr.mxu0 0.0
  %442 = vmatpush1.msra.mxu0 0.0
  %443 = vmatprep.subr.mxu0 0.0
  %444 = vmatpush1.msra.mxu0 0.0
  %445 = vmatprep.subr.mxu0 0.0
  %446 = vmatpush1.msra.mxu0 0.0
  %447 = vmatprep.subr.mxu0 0.0
  %448 = vmatpush1.msra.mxu0 0.0
  %449 = vmatprep.subr.mxu0 0.0
  %450 = vmatpush1.msra.mxu0 0.0
  %451 = vmatprep.subr.mxu0 0.0
  %452 = vmatpush1.msra.mxu0 0.0
  %453 = vmatprep.subr.mxu0 0.0
  %454 = vmatpush1.msra.mxu0 0.0
  %455 = vmatprep.subr.mxu0 0.0
  %456 = vmatpush1.msra.mxu0 0.0
  %457 = vmatprep.subr.mxu0 0.0
  %458 = vmatpush1.msra.mxu0 0.0
  %459 = vmatprep.subr.mxu0 0.0
  %460 = vmatpush1.msra.mxu0 0.0
  %461 = vmatprep.subr.mxu0 0.0
  %462 = vmatpush1.msra.mxu0 0.0
  %463 = vmatprep.subr.mxu0 0.0
  %464 = vmatpush1.msra.mxu0 0.0
  %465 = vmatprep.subr.mxu0 0.0
  %466 = vmatpush1.msra.mxu0 0.0
  %467 = vmatprep.subr.mxu0 0.0
  %468 = vmatpush1.msra.mxu0 0.0
  %469 = vmatprep.subr.mxu0 0.0
  %470 = vmatpush1.msra.mxu0 0.0
  %471 = vmatprep.subr.mxu0 0.0
  %472 = vmatpush1.msra.mxu0 0.0
  %473 = vmatprep.subr.mxu0 0.0
  %474 = vmatpush1.msra.mxu0 0.0
  %475 = vmatprep.subr.mxu0 0.0
  %476 = vmatpush1.msra.mxu0 0.0
  %477 = vmatprep.subr.mxu0 0.0
  %478 = vmatpush1.msra.mxu0 0.0
  %479 = vmatprep.mubr.f32.mxu0 0.0
  %480 = vmatmul.mubr.f32.gmra.mrb[0].mxu0 %v413
  %v481 = vpop.f32.mrb[0].mxu0
  %v482 = vadd.f32 0.0, %v481
  %v483 = vpop.f32.mrb[0].mxu0
  %484 = vdwg.mxu0
  %v485 = vadd.f32 %v411, %v482
  %v486 = vrot.slane %v95, 4
  %v488 = vadd.f32 %v485, %v486
  %v489 = vmax.f32 %v488, 0.0
  %v490 = vmul.f32 %v488, 0.999
  %v492 = vsel %vm98, %v489, 0
  %494 = vmatprep.subr.mxu0 0.0
  %495 = vmatpush1.msra.mxu0 %v13
  %496 = vmatprep.subr.mxu0 0.0
  %497 = vmatpush1.msra.mxu0 %v14
  %498 = vmatprep.subr.mxu0 0.0
  %499 = vmatpush1.msra.mxu0 %v15
  %500 = vmatprep.subr.mxu0 0.0
  %501 = vmatpush1.msra.mxu0 %v16
  %502 = vmatprep.subr.mxu0 0.0
  %503 = vmatpush1.msra.mxu0 0.0
  %504 = vmatprep.subr.mxu0 0.0
  %505 = vmatpush1.msra.mxu0 0.0
  %506 = vmatprep.subr.mxu0 0.0
  %507 = vmatpush1.msra.mxu0 0.0
  %508 = vmatprep.subr.mxu0 0.0
  %509 = vmatpush1.msra.mxu0 0.0
  %510 = vmatprep.subr.mxu0 0.0
  %511 = vmatpush1.msra.mxu0 0.0
  %512 = vmatprep.subr.mxu0 0.0
  %513 = vmatpush1.msra.mxu0 0.0
  %514 = vmatprep.subr.mxu0 0.0
  %515 = vmatpush1.msra.mxu0 0.0
  %516 = vmatprep.subr.mxu0 0.0
  %517 = vmatpush1.msra.mxu0 0.0
  %518 = vmatprep.subr.mxu0 0.0
  %519 = vmatpush1.msra.mxu0 0.0
  %520 = vmatprep.subr.mxu0 0.0
  %521 = vmatpush1.msra.mxu0 0.0
  %522 = vmatprep.subr.mxu0 0.0
  %523 = vmatpush1.msra.mxu0 0.0
  %524 = vmatprep.subr.mxu0 0.0
  %525 = vmatpush1.msra.mxu0 0.0
  %526 = vmatprep.subr.mxu0 0.0
  %527 = vmatpush1.msra.mxu0 0.0
  %528 = vmatprep.subr.mxu0 0.0
  %529 = vmatpush1.msra.mxu0 0.0
  %530 = vmatprep.subr.mxu0 0.0
  %531 = vmatpush1.msra.mxu0 0.0
  %532 = vmatprep.subr.mxu0 0.0
  %533 = vmatpush1.msra.mxu0 0.0
  %534 = vmatprep.subr.mxu0 0.0
  %535 = vmatpush1.msra.mxu0 0.0
  %536 = vmatprep.subr.mxu0 0.0
  %537 = vmatpush1.msra.mxu0 0.0
  %538 = vmatprep.subr.mxu0 0.0
  %539 = vmatpush1.msra.mxu0 0.0
  %540 = vmatprep.subr.mxu0 0.0
  %541 = vmatpush1.msra.mxu0 0.0
  %542 = vmatprep.subr.mxu0 0.0
  %543 = vmatpush1.msra.mxu0 0.0
  %544 = vmatprep.subr.mxu0 0.0
  %545 = vmatpush1.msra.mxu0 0.0
  %546 = vmatprep.subr.mxu0 0.0
  %547 = vmatpush1.msra.mxu0 0.0
  %548 = vmatprep.subr.mxu0 0.0
  %549 = vmatpush1.msra.mxu0 0.0
  %550 = vmatprep.subr.mxu0 0.0
  %551 = vmatpush1.msra.mxu0 0.0
  %552 = vmatprep.subr.mxu0 0.0
  %553 = vmatpush1.msra.mxu0 0.0
  %554 = vmatprep.subr.mxu0 0.0
  %555 = vmatpush1.msra.mxu0 0.0
  %556 = vmatprep.subr.mxu0 0.0
  %557 = vmatpush1.msra.mxu0 0.0
  %558 = vmatprep.mubr.f32.mxu0 0.0
  %559 = vmatmul.mubr.f32.gmra.mrb[0].mxu0 %v492
  %v560 = vpop.f32.mrb[0].mxu0
  %v561 = vadd.f32 0.0, %v560
  %v562 = vpop.f32.mrb[0].mxu0
  %563 = vdwg.mxu0
  %v564 = vadd.f32 %v490, %v561
  %v565 = vrot.slane %v95, 5
  %v567 = vadd.f32 %v564, %v565
  %v568 = vmax.f32 %v567, 0.0
  %v569 = vmul.f32 %v567, 0.999
  %v571 = vsel %vm98, %v568, 0
  %573 = vmatprep.subr.mxu0 0.0
  %574 = vmatpush1.msra.mxu0 %v13
  %575 = vmatprep.subr.mxu0 0.0
  %576 = vmatpush1.msra.mxu0 %v14
  %577 = vmatprep.subr.mxu0 0.0
  %578 = vmatpush1.msra.mxu0 %v15
  %579 = vmatprep.subr.mxu0 0.0
  %580 = vmatpush1.msra.mxu0 %v16
  %581 = vmatprep.subr.mxu0 0.0
  %582 = vmatpush1.msra.mxu0 0.0
  %583 = vmatprep.subr.mxu0 0.0
  %584 = vmatpush1.msra.mxu0 0.0
  %585 = vmatprep.subr.mxu0 0.0
  %586 = vmatpush1.msra.mxu0 0.0
  %587 = vmatprep.subr.mxu0 0.0
  %588 = vmatpush1.msra.mxu0 0.0
  %589 = vmatprep.subr.mxu0 0.0
  %590 = vmatpush1.msra.mxu0 0.0
  %591 = vmatprep.subr.mxu0 0.0
  %592 = vmatpush1.msra.mxu0 0.0
  %593 = vmatprep.subr.mxu0 0.0
  %594 = vmatpush1.msra.mxu0 0.0
  %595 = vmatprep.subr.mxu0 0.0
  %596 = vmatpush1.msra.mxu0 0.0
  %597 = vmatprep.subr.mxu0 0.0
  %598 = vmatpush1.msra.mxu0 0.0
  %599 = vmatprep.subr.mxu0 0.0
  %600 = vmatpush1.msra.mxu0 0.0
  %601 = vmatprep.subr.mxu0 0.0
  %602 = vmatpush1.msra.mxu0 0.0
  %603 = vmatprep.subr.mxu0 0.0
  %604 = vmatpush1.msra.mxu0 0.0
  %605 = vmatprep.subr.mxu0 0.0
  %606 = vmatpush1.msra.mxu0 0.0
  %607 = vmatprep.subr.mxu0 0.0
  %608 = vmatpush1.msra.mxu0 0.0
  %609 = vmatprep.subr.mxu0 0.0
  %610 = vmatpush1.msra.mxu0 0.0
  %611 = vmatprep.subr.mxu0 0.0
  %612 = vmatpush1.msra.mxu0 0.0
  %613 = vmatprep.subr.mxu0 0.0
  %614 = vmatpush1.msra.mxu0 0.0
  %615 = vmatprep.subr.mxu0 0.0
  %616 = vmatpush1.msra.mxu0 0.0
  %617 = vmatprep.subr.mxu0 0.0
  %618 = vmatpush1.msra.mxu0 0.0
  %619 = vmatprep.subr.mxu0 0.0
  %620 = vmatpush1.msra.mxu0 0.0
  %621 = vmatprep.subr.mxu0 0.0
  %622 = vmatpush1.msra.mxu0 0.0
  %623 = vmatprep.subr.mxu0 0.0
  %624 = vmatpush1.msra.mxu0 0.0
  %625 = vmatprep.subr.mxu0 0.0
  %626 = vmatpush1.msra.mxu0 0.0
  %627 = vmatprep.subr.mxu0 0.0
  %628 = vmatpush1.msra.mxu0 0.0
  %629 = vmatprep.subr.mxu0 0.0
  %630 = vmatpush1.msra.mxu0 0.0
  %631 = vmatprep.subr.mxu0 0.0
  %632 = vmatpush1.msra.mxu0 0.0
  %633 = vmatprep.subr.mxu0 0.0
  %634 = vmatpush1.msra.mxu0 0.0
  %635 = vmatprep.subr.mxu0 0.0
  %636 = vmatpush1.msra.mxu0 0.0
  %637 = vmatprep.mubr.f32.mxu0 0.0
  %638 = vmatmul.mubr.f32.gmra.mrb[0].mxu0 %v571
  %v639 = vpop.f32.mrb[0].mxu0
  %v640 = vadd.f32 0.0, %v639
  %v641 = vpop.f32.mrb[0].mxu0
  %642 = vdwg.mxu0
  %v643 = vadd.f32 %v569, %v640
  %v644 = vrot.slane %v95, 6
  %v646 = vadd.f32 %v643, %v644
  %v647 = vmax.f32 %v646, 0.0
  %v648 = vmul.f32 %v646, 0.999
  %v650 = vsel %vm98, %v647, 0
  %652 = vmatprep.subr.mxu0 0.0
  %653 = vmatpush1.msra.mxu0 %v13
  %654 = vmatprep.subr.mxu0 0.0
  %655 = vmatpush1.msra.mxu0 %v14
  %656 = vmatprep.subr.mxu0 0.0
  %657 = vmatpush1.msra.mxu0 %v15
  %658 = vmatprep.subr.mxu0 0.0
  %659 = vmatpush1.msra.mxu0 %v16
  %660 = vmatprep.subr.mxu0 0.0
  %661 = vmatpush1.msra.mxu0 0.0
  %662 = vmatprep.subr.mxu0 0.0
  %663 = vmatpush1.msra.mxu0 0.0
  %664 = vmatprep.subr.mxu0 0.0
  %665 = vmatpush1.msra.mxu0 0.0
  %666 = vmatprep.subr.mxu0 0.0
  %667 = vmatpush1.msra.mxu0 0.0
  %668 = vmatprep.subr.mxu0 0.0
  %669 = vmatpush1.msra.mxu0 0.0
  %670 = vmatprep.subr.mxu0 0.0
  %671 = vmatpush1.msra.mxu0 0.0
  %672 = vmatprep.subr.mxu0 0.0
  %673 = vmatpush1.msra.mxu0 0.0
  %674 = vmatprep.subr.mxu0 0.0
  %675 = vmatpush1.msra.mxu0 0.0
  %676 = vmatprep.subr.mxu0 0.0
  %677 = vmatpush1.msra.mxu0 0.0
  %678 = vmatprep.subr.mxu0 0.0
  %679 = vmatpush1.msra.mxu0 0.0
  %680 = vmatprep.subr.mxu0 0.0
  %681 = vmatpush1.msra.mxu0 0.0
  %682 = vmatprep.subr.mxu0 0.0
  %683 = vmatpush1.msra.mxu0 0.0
  %684 = vmatprep.subr.mxu0 0.0
  %685 = vmatpush1.msra.mxu0 0.0
  %686 = vmatprep.subr.mxu0 0.0
  %687 = vmatpush1.msra.mxu0 0.0
  %688 = vmatprep.subr.mxu0 0.0
  %689 = vmatpush1.msra.mxu0 0.0
  %690 = vmatprep.subr.mxu0 0.0
  %691 = vmatpush1.msra.mxu0 0.0
  %692 = vmatprep.subr.mxu0 0.0
  %693 = vmatpush1.msra.mxu0 0.0
  %694 = vmatprep.subr.mxu0 0.0
  %695 = vmatpush1.msra.mxu0 0.0
  %696 = vmatprep.subr.mxu0 0.0
  %697 = vmatpush1.msra.mxu0 0.0
  %698 = vmatprep.subr.mxu0 0.0
  %699 = vmatpush1.msra.mxu0 0.0
  %700 = vmatprep.subr.mxu0 0.0
  %701 = vmatpush1.msra.mxu0 0.0
  %702 = vmatprep.subr.mxu0 0.0
  %703 = vmatpush1.msra.mxu0 0.0
  %704 = vmatprep.subr.mxu0 0.0
  %705 = vmatpush1.msra.mxu0 0.0
  %706 = vmatprep.subr.mxu0 0.0
  %707 = vmatpush1.msra.mxu0 0.0
  %708 = vmatprep.subr.mxu0 0.0
  %709 = vmatpush1.msra.mxu0 0.0
  %710 = vmatprep.subr.mxu0 0.0
  %711 = vmatpush1.msra.mxu0 0.0
  %712 = vmatprep.subr.mxu0 0.0
  %713 = vmatpush1.msra.mxu0 0.0
  %714 = vmatprep.subr.mxu0 0.0
  %715 = vmatpush1.msra.mxu0 0.0
  %716 = vmatprep.mubr.f32.mxu0 0.0
  %717 = vmatmul.mubr.f32.gmra.mrb[0].mxu0 %v650
  %v718 = vpop.f32.mrb[0].mxu0
  %v719 = vadd.f32 0.0, %v718
  %v720 = vpop.f32.mrb[0].mxu0
  %721 = vdwg.mxu0
  %v722 = vadd.f32 %v648, %v719
  %v723 = vrot.slane %v95, 7
  %v725 = vadd.f32 %v722, %v723
  %v726 = vmax.f32 %v725, 0.0
  %v727 = vrot.slane %v252, 7
  %v729 = vrot.slane %v331, 6
  %v731 = vrot.slane %v410, 5
  %v733 = vrot.slane %v489, 4
  %v735 = vrot.slane %v568, 3
  %v737 = vrot.slane %v647, 2
  %v740 = vrot.slane %v726, 1
  %vm742 = vcmask 1040384
  %v743 = vsel %vm742, %v172, %v727
  %vm744 = vcmask 1041408
  %v745 = vsel %vm744, %v743, %v729
  %vm746 = vcmask 1042432
  %v747 = vsel %vm746, %v745, %v731
  %vm748 = vcmask 1043456
  %v749 = vsel %vm748, %v747, %v733
  %vm750 = vcmask 1044480
  %v751 = vsel %vm750, %v749, %v735
  %vm752 = vcmask 1045504
  %v753 = vsel %vm752, %v751, %v737
  %vm754 = vcmask 1046528
  %v755 = vsel %vm754, %v753, %v740
  %v757 = vsel %vm98, %v755, 0
  %759 = vmatprep.subr.mxu0 0.0
  %760 = vmatpush1.msra.mxu0 %v17
  %761 = vmatprep.subr.mxu0 0.0
  %762 = vmatpush1.msra.mxu0 %v18
  %763 = vmatprep.subr.mxu0 0.0
  %764 = vmatpush1.msra.mxu0 %v19
  %765 = vmatprep.subr.mxu0 0.0
  %766 = vmatpush1.msra.mxu0 %v20
  %767 = vmatprep.subr.mxu0 0.0
  %768 = vmatpush1.msra.mxu0 0.0
  %769 = vmatprep.subr.mxu0 0.0
  %770 = vmatpush1.msra.mxu0 0.0
  %771 = vmatprep.subr.mxu0 0.0
  %772 = vmatpush1.msra.mxu0 0.0
  %773 = vmatprep.subr.mxu0 0.0
  %774 = vmatpush1.msra.mxu0 0.0
  %775 = vmatprep.subr.mxu0 0.0
  %776 = vmatpush1.msra.mxu0 0.0
  %777 = vmatprep.subr.mxu0 0.0
  %778 = vmatpush1.msra.mxu0 0.0
  %779 = vmatprep.subr.mxu0 0.0
  %780 = vmatpush1.msra.mxu0 0.0
  %781 = vmatprep.subr.mxu0 0.0
  %782 = vmatpush1.msra.mxu0 0.0
  %783 = vmatprep.subr.mxu0 0.0
  %784 = vmatpush1.msra.mxu0 0.0
  %785 = vmatprep.subr.mxu0 0.0
  %786 = vmatpush1.msra.mxu0 0.0
  %787 = vmatprep.subr.mxu0 0.0
  %788 = vmatpush1.msra.mxu0 0.0
  %789 = vmatprep.subr.mxu0 0.0
  %790 = vmatpush1.msra.mxu0 0.0
  %791 = vmatprep.subr.mxu0 0.0
  %792 = vmatpush1.msra.mxu0 0.0
  %793 = vmatprep.subr.mxu0 0.0
  %794 = vmatpush1.msra.mxu0 0.0
  %795 = vmatprep.subr.mxu0 0.0
  %796 = vmatpush1.msra.mxu0 0.0
  %797 = vmatprep.subr.mxu0 0.0
  %798 = vmatpush1.msra.mxu0 0.0
  %799 = vmatprep.subr.mxu0 0.0
  %800 = vmatpush1.msra.mxu0 0.0
  %801 = vmatprep.subr.mxu0 0.0
  %802 = vmatpush1.msra.mxu0 0.0
  %803 = vmatprep.subr.mxu0 0.0
  %804 = vmatpush1.msra.mxu0 0.0
  %805 = vmatprep.subr.mxu0 0.0
  %806 = vmatpush1.msra.mxu0 0.0
  %807 = vmatprep.subr.mxu0 0.0
  %808 = vmatpush1.msra.mxu0 0.0
  %809 = vmatprep.subr.mxu0 0.0
  %810 = vmatpush1.msra.mxu0 0.0
  %811 = vmatprep.subr.mxu0 0.0
  %812 = vmatpush1.msra.mxu0 0.0
  %813 = vmatprep.subr.mxu0 0.0
  %814 = vmatpush1.msra.mxu0 0.0
  %815 = vmatprep.subr.mxu0 0.0
  %816 = vmatpush1.msra.mxu0 0.0
  %817 = vmatprep.subr.mxu0 0.0
  %818 = vmatpush1.msra.mxu0 0.0
  %819 = vmatprep.subr.mxu0 0.0
  %820 = vmatpush1.msra.mxu0 0.0
  %821 = vmatprep.subr.mxu0 0.0
  %822 = vmatpush1.msra.mxu0 0.0
  %823 = vmatprep.mubr.f32.mxu0 0.0
  %824 = vmatmul.mubr.f32.gmra.mrb[0].mxu0 %v757
  %v825 = vpop.f32.mrb[0].mxu0
  %v826 = vadd.f32 0.0, %v825
  %v827 = vpop.f32.mrb[0].mxu0
  %828 = vdwg.mxu0
  %v830 = vrot.slane %v826, 7
  %vm831 = vcmask 64512
  %v832 = vsel %vm831, %v830, 0
  %834 = vmatprep.subr.mxu0 0.0
  %835 = vmatpush1.msra.mxu0 %v21
  %836 = vmatprep.subr.mxu0 0.0
  %837 = vmatpush1.msra.mxu0 0.0
  %838 = vmatprep.subr.mxu0 0.0
  %839 = vmatpush1.msra.mxu0 0.0
  %840 = vmatprep.subr.mxu0 0.0
  %841 = vmatpush1.msra.mxu0 0.0
  %842 = vmatprep.subr.mxu0 0.0
  %843 = vmatpush1.msra.mxu0 0.0
  %844 = vmatprep.subr.mxu0 0.0
  %845 = vmatpush1.msra.mxu0 0.0
  %846 = vmatprep.subr.mxu0 0.0
  %847 = vmatpush1.msra.mxu0 0.0
  %848 = vmatprep.subr.mxu0 0.0
  %849 = vmatpush1.msra.mxu0 0.0
  %850 = vmatprep.subr.mxu0 0.0
  %851 = vmatpush1.msra.mxu0 0.0
  %852 = vmatprep.subr.mxu0 0.0
  %853 = vmatpush1.msra.mxu0 0.0
  %854 = vmatprep.subr.mxu0 0.0
  %855 = vmatpush1.msra.mxu0 0.0
  %856 = vmatprep.subr.mxu0 0.0
  %857 = vmatpush1.msra.mxu0 0.0
  %858 = vmatprep.subr.mxu0 0.0
  %859 = vmatpush1.msra.mxu0 0.0
  %860 = vmatprep.subr.mxu0 0.0
  %861 = vmatpush1.msra.mxu0 0.0
  %862 = vmatprep.subr.mxu0 0.0
  %863 = vmatpush1.msra.mxu0 0.0
  %864 = vmatprep.subr.mxu0 0.0
  %865 = vmatpush1.msra.mxu0 0.0
  %866 = vmatprep.subr.mxu0 0.0
  %867 = vmatpush1.msra.mxu0 0.0
  %868 = vmatprep.subr.mxu0 0.0
  %869 = vmatpush1.msra.mxu0 0.0
  %870 = vmatprep.subr.mxu0 0.0
  %871 = vmatpush1.msra.mxu0 0.0
  %872 = vmatprep.subr.mxu0 0.0
  %873 = vmatpush1.msra.mxu0 0.0
  %874 = vmatprep.subr.mxu0 0.0
  %875 = vmatpush1.msra.mxu0 0.0
  %876 = vmatprep.subr.mxu0 0.0
  %877 = vmatpush1.msra.mxu0 0.0
  %878 = vmatprep.subr.mxu0 0.0
  %879 = vmatpush1.msra.mxu0 0.0
  %880 = vmatprep.subr.mxu0 0.0
  %881 = vmatpush1.msra.mxu0 0.0
  %882 = vmatprep.subr.mxu0 0.0
  %883 = vmatpush1.msra.mxu0 0.0
  %884 = vmatprep.subr.mxu0 0.0
  %885 = vmatpush1.msra.mxu0 0.0
  %886 = vmatprep.subr.mxu0 0.0
  %887 = vmatpush1.msra.mxu0 0.0
  %888 = vmatprep.subr.mxu0 0.0
  %889 = vmatpush1.msra.mxu0 0.0
  %890 = vmatprep.subr.mxu0 0.0
  %891 = vmatpush1.msra.mxu0 0.0
  %892 = vmatprep.subr.mxu0 0.0
  %893 = vmatpush1.msra.mxu0 0.0
  %894 = vmatprep.subr.mxu0 0.0
  %895 = vmatpush1.msra.mxu0 0.0
  %896 = vmatprep.subr.mxu0 0.0
  %897 = vmatpush1.msra.mxu0 0.0
  %898 = vmatprep.mubr.f32.mxu0 0.0
  %899 = vmatmul.mubr.f32.gmra.mrb[0].mxu0 %v832
  %v900 = vpop.f32.mrb[0].mxu0
  %v901 = vadd.f32 %v22, %v900
  %v902 = vpop.f32.mrb[0].mxu0
  %903 = vdwg.mxu0
  %vm904 = vcmask 8192
  %v905 = vsel %vm904, %v901, -inf
  %906 = vmax.xlane.f32.xlu0 %v905
  %v907 = vpop.xlane.xlu0 %906
  %v908 = vsub.f32 %v901, %v907
  %v909 = vmul.f32 %v908, 1.442695
  %v910 = vpow.pop %v909
  %v911 = vsel %vm904, %v910, 0.0
  %912 = vadd.xlane.f32.xlu0 %v911
  %v913 = vpop.xlane.xlu0 %912
  %v914 = vrcp.pop %v913
  %v915 = vmul.f32 %v910, %v914
  %vm916 = vcmask 15360
  %v917 = vsel %vm916, %v915, 0.0
  %v918 = vsel %vm742, %v917, 0.0
  %919 = vst.msk [vmem:[%s2] sm:$0xff] %vm831, %v826
  %920 = vst.msk [vmem:[%s2 + $0x8] sm:$0xff] %vm831, %v918
  // Predicated region
  $region10: #{eirnn_forward_pallas.1} parent=0 // pred_check
    _
  $region11: #{eirnn_forward_pallas.1} parent=0 // pred_check_branch
    %922 = sbr.rel (0) target = $region13
  $region12: #{eirnn_forward_pallas.1} parent=0 // pred_region
    _
  $region13: #{eirnn_forward_pallas.1} parent=0 // pred_fallthru
    _
  // Predicated region
  $region14: #{eirnn_forward_pallas.1} parent=0 // pred_check
    _
  $region15: #{eirnn_forward_pallas.1} parent=0 // pred_check_branch
    %924 = sbr.rel (0) target = $region17
  $region16: #{eirnn_forward_pallas.1} parent=0 // pred_region
    _
  $region17: #{eirnn_forward_pallas.1} parent=0 // pred_fallthru
    _

</llo_original>
